<compile_context>
chip_gen: v6e
topology: v6e:2x2x1
jax: 0.10.0
libtpu: 0.0.40
codegen_flags: <defaults>
</compile_context>

<pallas_src>
import functools

import jax
import jax.numpy as jnp
from jax import lax
from jax.experimental import pallas as pl
from jax.experimental.pallas import tpu as pltpu

INPUT_DIM = 24
HIDDEN_DIM = 32
INTER_DIM = 16
OUT_DIM = 4


def _lstm_classifier_kernel(x_ref, wih_ref, whh_ref, b_ref,
                            w1_ref, b1_ref, w2_ref, b2_ref,
                            out_ref, *, seq_len, batch):
    """Whole forward pass in one kernel invocation (everything fits in VMEM).

    x_ref  : (T*B, 24)  bf16  time-major, flattened input
    wih_ref: (24, 4H)   bf16  input->gates weight (pre-transposed)
    whh_ref: (H, 4H)    bf16  hidden->gates weight (pre-transposed)
    b_ref  : (1, 4H)    f32   b_ih + b_hh
    w1_ref : (H, 16) bf16, b1_ref: (1, 16) f32
    w2_ref : (16, 4) bf16, b2_ref: (1, 4)  f32
    out_ref: (B, 4)     f32   log-softmax output
    """
    T, B = seq_len, batch
    H = whh_ref.shape[0]

    # ---- Hoisted input projection: ONE MXU matmul for all timesteps. -------
    # (T*B, 24) x (24, 4H) -> (T*B, 4H), f32 accumulation, bias folded in.
    gx = jnp.dot(x_ref[...], wih_ref[...],
                 preferred_element_type=jnp.float32) + b_ref[...]

    w_hh = whh_ref[...]                      # (H, 4H) bf16, loop-invariant

    # Zero initial hidden / cell state (PyTorch default when (h0,c0) not given).
    h = jnp.zeros((B, H), jnp.float32)
    c = jnp.zeros((B, H), jnp.float32)

    # ---- Recurrence: fully unrolled (T static & small). --------------------
    # Only h @ W_hh remains on the serial critical path; h/c live in vregs.
    # For large T, switch to lax.fori_loop with a partial unroll factor.
    for t in range(T):
        gates = gx[t * B:(t + 1) * B, :] + jnp.dot(
            h.astype(jnp.bfloat16), w_hh,
            preferred_element_type=jnp.float32)          # (B, 4H) f32

        # Two full-width EUP passes instead of four per-gate passes.
        sig = jax.nn.sigmoid(gates)
        th = jnp.tanh(gates)

        # PyTorch gate order: i, f, g, o
        i = sig[:, 0 * H:1 * H]
        f = sig[:, 1 * H:2 * H]
        g = th[:, 2 * H:3 * H]
        o = sig[:, 3 * H:4 * H]

        c = f * c + i * g
        h = o * jnp.tanh(c)

    # ---- Head: hidden2inter -> ReLU -> hidden2out -> LogSoftmax(dim=1) -----
    inter = jnp.dot(h.astype(jnp.bfloat16), w1_ref[...],
                    preferred_element_type=jnp.float32) + b1_ref[...]
    inter = jnp.maximum(inter, 0.0)
    logits = jnp.dot(inter.astype(jnp.bfloat16), w2_ref[...],
                     preferred_element_type=jnp.float32) + b2_ref[...]  # (B, 4)

    m = jnp.max(logits, axis=1, keepdims=True)
    z = logits - m
    lse = jnp.log(jnp.sum(jnp.exp(z), axis=1, keepdims=True))
    out_ref[...] = z - lse


def lstm_classifier_forward(x, params):
    """x: (B, T, 24) float32, batch-first like the PyTorch module."""
    B, T, I = x.shape
    assert I == INPUT_DIM
    w_ih, w_hh, b_ih, b_hh, w1, b1, w2, b2 = params

    # Time-major + flatten so the hoisted input projection is a single
    # MXU-friendly (T*B, 24) x (24, 4H) matmul inside the kernel.
    # Negligible cost at this size; for large T*B, fold this relayout into a
    # gridded gates_x precompute instead of a separate XLA transpose pass.
    x2d = jnp.transpose(x, (1, 0, 2)).reshape(T * B, I).astype(jnp.bfloat16)

    kernel = functools.partial(_lstm_classifier_kernel, seq_len=T, batch=B)
    vmem = pl.BlockSpec(memory_space=pltpu.MemorySpace.VMEM)

    return pl.pallas_call(
        kernel,
        out_shape=jax.ShapeDtypeStruct((B, OUT_DIM), jnp.float32),
        in_specs=[vmem] * 8,
        out_specs=vmem,
    )(
        x2d,                                             # (T*B, 24) bf16
        w_ih.astype(jnp.bfloat16),                       # (24, 4H)
        w_hh.astype(jnp.bfloat16),                       # (H, 4H)
        (b_ih + b_hh).reshape(1, -1).astype(jnp.float32),  # (1, 4H)
        w1.astype(jnp.bfloat16),                         # (H, 16)
        b1.reshape(1, -1).astype(jnp.float32),           # (1, 16)
        w2.astype(jnp.bfloat16),                         # (16, 4)
        b2.reshape(1, -1).astype(jnp.float32),           # (1, 4)
    )


def init_params(key, hidden_dim=HIDDEN_DIM):
    """Deterministic synthetic params with PyTorch-like init.

    PyTorch stores weight_ih_l0 as (4H, 24) etc.; we keep them pre-transposed
    for right-multiplication inside the kernel.
    """
    ks = jax.random.split(key, 8)
    s = 1.0 / jnp.sqrt(hidden_dim)
    w_ih = jax.random.uniform(ks[0], (INPUT_DIM, 4 * hidden_dim), jnp.float32, -s, s)
    w_hh = jax.random.uniform(ks[1], (hidden_dim, 4 * hidden_dim), jnp.float32, -s, s)
    b_ih = jax.random.uniform(ks[2], (4 * hidden_dim,), jnp.float32, -s, s)
    b_hh = jax.random.uniform(ks[3], (4 * hidden_dim,), jnp.float32, -s, s)
    w1 = jax.random.uniform(ks[4], (hidden_dim, INTER_DIM), jnp.float32, -s, s)
    b1 = jax.random.uniform(ks[5], (INTER_DIM,), jnp.float32, -s, s)
    s2 = 1.0 / jnp.sqrt(INTER_DIM)
    w2 = jax.random.uniform(ks[6], (INTER_DIM, OUT_DIM), jnp.float32, -s2, s2)
    b2 = jax.random.uniform(ks[7], (OUT_DIM,), jnp.float32, -s2, s2)
    return (w_ih, w_hh, b_ih, b_hh, w1, b1, w2, b2)


def reference_forward(x, params):
    """Pure-JAX f32 reference (same math), for correctness checking."""
    w_ih, w_hh, b_ih, b_hh, w1, b1, w2, b2 = params
    B, T, _ = x.shape
    H = w_hh.shape[0]
    h = jnp.zeros((B, H), jnp.float32)
    c = jnp.zeros((B, H), jnp.float32)

    def step(carry, x_t):
        h, c = carry
        gates = x_t @ w_ih + h @ w_hh + b_ih + b_hh
        i = jax.nn.sigmoid(gates[:, 0 * H:1 * H])
        f = jax.nn.sigmoid(gates[:, 1 * H:2 * H])
        g = jnp.tanh(gates[:, 2 * H:3 * H])
        o = jax.nn.sigmoid(gates[:, 3 * H:4 * H])
        c = f * c + i * g
        h = o * jnp.tanh(c)
        return (h, c), None

    (h, c), _ = lax.scan(step, (h, c), jnp.transpose(x, (1, 0, 2)))
    inter = jnp.maximum(h @ w1 + b1, 0.0)
    logits = inter @ w2 + b2
    return jax.nn.log_softmax(logits, axis=1)


if __name__ == "__main__":
    key = jax.random.PRNGKey(0)
    kx, kp = jax.random.split(key)

    B, T = 2, 8
    x = jax.random.normal(kx, (B, T, INPUT_DIM), jnp.float32)  # batch-first
    params = init_params(kp, HIDDEN_DIM)

    out = jax.block_until_ready(lstm_classifier_forward(x, params))
    ref = reference_forward(x, params)

    assert out.shape == (B, OUT_DIM)
    # Kernel uses bf16 MXU operands (f32 accumulation); compare against the
    # f32 reference with a correspondingly relaxed tolerance.
    assert jnp.allclose(out, ref, atol=5e-2, rtol=5e-2), (out, ref)

    print("KERNEL_OK")
</pallas_src>

<mosaic_0001>
module attributes {stable_mosaic.version = 11 : i64} {
  func.func @_lstm_classifier_kernel(%arg0: memref<16x24xbf16, #tpu.memory_space<vmem>>, %arg1: memref<24x128xbf16, #tpu.memory_space<vmem>>, %arg2: memref<32x128xbf16, #tpu.memory_space<vmem>>, %arg3: memref<1x128xf32, #tpu.memory_space<vmem>>, %arg4: memref<32x16xbf16, #tpu.memory_space<vmem>>, %arg5: memref<1x16xf32, #tpu.memory_space<vmem>>, %arg6: memref<16x4xbf16, #tpu.memory_space<vmem>>, %arg7: memref<1x4xf32, #tpu.memory_space<vmem>>, %arg8: memref<2x4xf32, #tpu.memory_space<vmem>>) attributes {dimension_semantics = [], scalar_prefetch = 0 : i64, scratch_operands = 0 : i64, tpu.core_type = #tpu.core_type<tc>} {
    %c0 = arith.constant 0 : index
    %c0_0 = arith.constant 0 : index
    %0 = vector.load %arg0[%c0, %c0_0] : memref<16x24xbf16, #tpu.memory_space<vmem>>, vector<16x24xbf16>
    %c0_1 = arith.constant 0 : index
    %c0_2 = arith.constant 0 : index
    %1 = vector.load %arg1[%c0_1, %c0_2] : memref<24x128xbf16, #tpu.memory_space<vmem>>, vector<24x128xbf16>
    %cst = arith.constant dense<0.000000e+00> : vector<16x128xf32>
    %2 = tpu.matmul %0, %1, %cst {dimension_numbers = #tpu.dot_dimension_numbers<[1], [0], [0], [1], [0, 0, 1, 1], [], []>} : vector<16x24xbf16>, vector<24x128xbf16>, vector<16x128xf32> -> vector<16x128xf32>
    %c0_3 = arith.constant 0 : index
    %c0_4 = arith.constant 0 : index
    %3 = vector.load %arg3[%c0_3, %c0_4] : memref<1x128xf32, #tpu.memory_space<vmem>>, vector<1x128xf32>
    %4 = vector.broadcast %3 : vector<1x128xf32> to vector<16x128xf32>
    %5 = arith.addf %2, %4 : vector<16x128xf32>
    %c0_5 = arith.constant 0 : index
    %c0_6 = arith.constant 0 : index
    %6 = vector.load %arg2[%c0_5, %c0_6] : memref<32x128xbf16, #tpu.memory_space<vmem>>, vector<32x128xbf16>
    %cst_7 = arith.constant 0.000000e+00 : f32
    %7 = vector.broadcast %cst_7 : f32 to vector<2x32xf32>
    %cst_8 = arith.constant 0.000000e+00 : f32
    %8 = vector.broadcast %cst_8 : f32 to vector<2x32xf32>
    %9 = vector.extract_strided_slice %5 {offsets = [0, 0], sizes = [2, 128], strides = [1, 1]} : vector<16x128xf32> to vector<2x128xf32>
    %10 = arith.truncf %7 : vector<2x32xf32> to vector<2x32xbf16>
    %cst_9 = arith.constant dense<0.000000e+00> : vector<2x128xf32>
    %11 = tpu.matmul %10, %6, %cst_9 {dimension_numbers = #tpu.dot_dimension_numbers<[1], [0], [0], [1], [0, 0, 1, 1], [], []>} : vector<2x32xbf16>, vector<32x128xbf16>, vector<2x128xf32> -> vector<2x128xf32>
    %12 = arith.addf %9, %11 : vector<2x128xf32>
    %13 = arith.negf %12 : vector<2x128xf32>
    %14 = math.exp %13 : vector<2x128xf32>
    %cst_10 = arith.constant 1.000000e+00 : f32
    %15 = vector.broadcast %cst_10 : f32 to vector<2x128xf32>
    %16 = arith.addf %15, %14 : vector<2x128xf32>
    %17 = arith.divf %15, %16 : vector<2x128xf32>
    %18 = math.tanh %12 : vector<2x128xf32>
    %19 = vector.extract_strided_slice %17 {offsets = [0, 0], sizes = [2, 32], strides = [1, 1]} : vector<2x128xf32> to vector<2x32xf32>
    %20 = vector.extract_strided_slice %17 {offsets = [0, 32], sizes = [2, 32], strides = [1, 1]} : vector<2x128xf32> to vector<2x32xf32>
    %21 = vector.extract_strided_slice %18 {offsets = [0, 64], sizes = [2, 32], strides = [1, 1]} : vector<2x128xf32> to vector<2x32xf32>
    %22 = vector.extract_strided_slice %17 {offsets = [0, 96], sizes = [2, 32], strides = [1, 1]} : vector<2x128xf32> to vector<2x32xf32>
    %23 = arith.mulf %20, %8 : vector<2x32xf32>
    %24 = arith.mulf %19, %21 : vector<2x32xf32>
    %25 = arith.addf %23, %24 : vector<2x32xf32>
    %26 = math.tanh %25 : vector<2x32xf32>
    %27 = arith.mulf %22, %26 : vector<2x32xf32>
    %28 = vector.extract_strided_slice %5 {offsets = [2, 0], sizes = [2, 128], strides = [1, 1]} : vector<16x128xf32> to vector<2x128xf32>
    %29 = arith.truncf %27 : vector<2x32xf32> to vector<2x32xbf16>
    %cst_11 = arith.constant dense<0.000000e+00> : vector<2x128xf32>
    %30 = tpu.matmul %29, %6, %cst_11 {dimension_numbers = #tpu.dot_dimension_numbers<[1], [0], [0], [1], [0, 0, 1, 1], [], []>} : vector<2x32xbf16>, vector<32x128xbf16>, vector<2x128xf32> -> vector<2x128xf32>
    %31 = arith.addf %28, %30 : vector<2x128xf32>
    %32 = arith.negf %31 : vector<2x128xf32>
    %33 = math.exp %32 : vector<2x128xf32>
    %cst_12 = arith.constant 1.000000e+00 : f32
    %34 = vector.broadcast %cst_12 : f32 to vector<2x128xf32>
    %35 = arith.addf %34, %33 : vector<2x128xf32>
    %36 = arith.divf %34, %35 : vector<2x128xf32>
    %37 = math.tanh %31 : vector<2x128xf32>
    %38 = vector.extract_strided_slice %36 {offsets = [0, 0], sizes = [2, 32], strides = [1, 1]} : vector<2x128xf32> to vector<2x32xf32>
    %39 = vector.extract_strided_slice %36 {offsets = [0, 32], sizes = [2, 32], strides = [1, 1]} : vector<2x128xf32> to vector<2x32xf32>
    %40 = vector.extract_strided_slice %37 {offsets = [0, 64], sizes = [2, 32], strides = [1, 1]} : vector<2x128xf32> to vector<2x32xf32>
    %41 = vector.extract_strided_slice %36 {offsets = [0, 96], sizes = [2, 32], strides = [1, 1]} : vector<2x128xf32> to vector<2x32xf32>
    %42 = arith.mulf %39, %25 : vector<2x32xf32>
    %43 = arith.mulf %38, %40 : vector<2x32xf32>
    %44 = arith.addf %42, %43 : vector<2x32xf32>
    %45 = math.tanh %44 : vector<2x32xf32>
    %46 = arith.mulf %41, %45 : vector<2x32xf32>
    %47 = vector.extract_strided_slice %5 {offsets = [4, 0], sizes = [2, 128], strides = [1, 1]} : vector<16x128xf32> to vector<2x128xf32>
    %48 = arith.truncf %46 : vector<2x32xf32> to vector<2x32xbf16>
    %cst_13 = arith.constant dense<0.000000e+00> : vector<2x128xf32>
    %49 = tpu.matmul %48, %6, %cst_13 {dimension_numbers = #tpu.dot_dimension_numbers<[1], [0], [0], [1], [0, 0, 1, 1], [], []>} : vector<2x32xbf16>, vector<32x128xbf16>, vector<2x128xf32> -> vector<2x128xf32>
    %50 = arith.addf %47, %49 : vector<2x128xf32>
    %51 = arith.negf %50 : vector<2x128xf32>
    %52 = math.exp %51 : vector<2x128xf32>
    %cst_14 = arith.constant 1.000000e+00 : f32
    %53 = vector.broadcast %cst_14 : f32 to vector<2x128xf32>
    %54 = arith.addf %53, %52 : vector<2x128xf32>
    %55 = arith.divf %53, %54 : vector<2x128xf32>
    %56 = math.tanh %50 : vector<2x128xf32>
    %57 = vector.extract_strided_slice %55 {offsets = [0, 0], sizes = [2, 32], strides = [1, 1]} : vector<2x128xf32> to vector<2x32xf32>
    %58 = vector.extract_strided_slice %55 {offsets = [0, 32], sizes = [2, 32], strides = [1, 1]} : vector<2x128xf32> to vector<2x32xf32>
    %59 = vector.extract_strided_slice %56 {offsets = [0, 64], sizes = [2, 32], strides = [1, 1]} : vector<2x128xf32> to vector<2x32xf32>
    %60 = vector.extract_strided_slice %55 {offsets = [0, 96], sizes = [2, 32], strides = [1, 1]} : vector<2x128xf32> to vector<2x32xf32>
    %61 = arith.mulf %58, %44 : vector<2x32xf32>
    %62 = arith.mulf %57, %59 : vector<2x32xf32>
    %63 = arith.addf %61, %62 : vector<2x32xf32>
    %64 = math.tanh %63 : vector<2x32xf32>
    %65 = arith.mulf %60, %64 : vector<2x32xf32>
    %66 = vector.extract_strided_slice %5 {offsets = [6, 0], sizes = [2, 128], strides = [1, 1]} : vector<16x128xf32> to vector<2x128xf32>
    %67 = arith.truncf %65 : vector<2x32xf32> to vector<2x32xbf16>
    %cst_15 = arith.constant dense<0.000000e+00> : vector<2x128xf32>
    %68 = tpu.matmul %67, %6, %cst_15 {dimension_numbers = #tpu.dot_dimension_numbers<[1], [0], [0], [1], [0, 0, 1, 1], [], []>} : vector<2x32xbf16>, vector<32x128xbf16>, vector<2x128xf32> -> vector<2x128xf32>
    %69 = arith.addf %66, %68 : vector<2x128xf32>
    %70 = arith.negf %69 : vector<2x128xf32>
    %71 = math.exp %70 : vector<2x128xf32>
    %cst_16 = arith.constant 1.000000e+00 : f32
    %72 = vector.broadcast %cst_16 : f32 to vector<2x128xf32>
    %73 = arith.addf %72, %71 : vector<2x128xf32>
    %74 = arith.divf %72, %73 : vector<2x128xf32>
    %75 = math.tanh %69 : vector<2x128xf32>
    %76 = vector.extract_strided_slice %74 {offsets = [0, 0], sizes = [2, 32], strides = [1, 1]} : vector<2x128xf32> to vector<2x32xf32>
    %77 = vector.extract_strided_slice %74 {offsets = [0, 32], sizes = [2, 32], strides = [1, 1]} : vector<2x128xf32> to vector<2x32xf32>
    %78 = vector.extract_strided_slice %75 {offsets = [0, 64], sizes = [2, 32], strides = [1, 1]} : vector<2x128xf32> to vector<2x32xf32>
    %79 = vector.extract_strided_slice %74 {offsets = [0, 96], sizes = [2, 32], strides = [1, 1]} : vector<2x128xf32> to vector<2x32xf32>
    %80 = arith.mulf %77, %63 : vector<2x32xf32>
    %81 = arith.mulf %76, %78 : vector<2x32xf32>
    %82 = arith.addf %80, %81 : vector<2x32xf32>
    %83 = math.tanh %82 : vector<2x32xf32>
    %84 = arith.mulf %79, %83 : vector<2x32xf32>
    %85 = vector.extract_strided_slice %5 {offsets = [8, 0], sizes = [2, 128], strides = [1, 1]} : vector<16x128xf32> to vector<2x128xf32>
    %86 = arith.truncf %84 : vector<2x32xf32> to vector<2x32xbf16>
    %cst_17 = arith.constant dense<0.000000e+00> : vector<2x128xf32>
    %87 = tpu.matmul %86, %6, %cst_17 {dimension_numbers = #tpu.dot_dimension_numbers<[1], [0], [0], [1], [0, 0, 1, 1], [], []>} : vector<2x32xbf16>, vector<32x128xbf16>, vector<2x128xf32> -> vector<2x128xf32>
    %88 = arith.addf %85, %87 : vector<2x128xf32>
    %89 = arith.negf %88 : vector<2x128xf32>
    %90 = math.exp %89 : vector<2x128xf32>
    %cst_18 = arith.constant 1.000000e+00 : f32
    %91 = vector.broadcast %cst_18 : f32 to vector<2x128xf32>
    %92 = arith.addf %91, %90 : vector<2x128xf32>
    %93 = arith.divf %91, %92 : vector<2x128xf32>
    %94 = math.tanh %88 : vector<2x128xf32>
    %95 = vector.extract_strided_slice %93 {offsets = [0, 0], sizes = [2, 32], strides = [1, 1]} : vector<2x128xf32> to vector<2x32xf32>
    %96 = vector.extract_strided_slice %93 {offsets = [0, 32], sizes = [2, 32], strides = [1, 1]} : vector<2x128xf32> to vector<2x32xf32>
    %97 = vector.extract_strided_slice %94 {offsets = [0, 64], sizes = [2, 32], strides = [1, 1]} : vector<2x128xf32> to vector<2x32xf32>
    %98 = vector.extract_strided_slice %93 {offsets = [0, 96], sizes = [2, 32], strides = [1, 1]} : vector<2x128xf32> to vector<2x32xf32>
    %99 = arith.mulf %96, %82 : vector<2x32xf32>
    %100 = arith.mulf %95, %97 : vector<2x32xf32>
    %101 = arith.addf %99, %100 : vector<2x32xf32>
    %102 = math.tanh %101 : vector<2x32xf32>
    %103 = arith.mulf %98, %102 : vector<2x32xf32>
    %104 = vector.extract_strided_slice %5 {offsets = [10, 0], sizes = [2, 128], strides = [1, 1]} : vector<16x128xf32> to vector<2x128xf32>
    %105 = arith.truncf %103 : vector<2x32xf32> to vector<2x32xbf16>
    %cst_19 = arith.constant dense<0.000000e+00> : vector<2x128xf32>
    %106 = tpu.matmul %105, %6, %cst_19 {dimension_numbers = #tpu.dot_dimension_numbers<[1], [0], [0], [1], [0, 0, 1, 1], [], []>} : vector<2x32xbf16>, vector<32x128xbf16>, vector<2x128xf32> -> vector<2x128xf32>
    %107 = arith.addf %104, %106 : vector<2x128xf32>
    %108 = arith.negf %107 : vector<2x128xf32>
    %109 = math.exp %108 : vector<2x128xf32>
    %cst_20 = arith.constant 1.000000e+00 : f32
    %110 = vector.broadcast %cst_20 : f32 to vector<2x128xf32>
    %111 = arith.addf %110, %109 : vector<2x128xf32>
    %112 = arith.divf %110, %111 : vector<2x128xf32>
    %113 = math.tanh %107 : vector<2x128xf32>
    %114 = vector.extract_strided_slice %112 {offsets = [0, 0], sizes = [2, 32], strides = [1, 1]} : vector<2x128xf32> to vector<2x32xf32>
    %115 = vector.extract_strided_slice %112 {offsets = [0, 32], sizes = [2, 32], strides = [1, 1]} : vector<2x128xf32> to vector<2x32xf32>
    %116 = vector.extract_strided_slice %113 {offsets = [0, 64], sizes = [2, 32], strides = [1, 1]} : vector<2x128xf32> to vector<2x32xf32>
    %117 = vector.extract_strided_slice %112 {offsets = [0, 96], sizes = [2, 32], strides = [1, 1]} : vector<2x128xf32> to vector<2x32xf32>
    %118 = arith.mulf %115, %101 : vector<2x32xf32>
    %119 = arith.mulf %114, %116 : vector<2x32xf32>
    %120 = arith.addf %118, %119 : vector<2x32xf32>
    %121 = math.tanh %120 : vector<2x32xf32>
    %122 = arith.mulf %117, %121 : vector<2x32xf32>
    %123 = vector.extract_strided_slice %5 {offsets = [12, 0], sizes = [2, 128], strides = [1, 1]} : vector<16x128xf32> to vector<2x128xf32>
    %124 = arith.truncf %122 : vector<2x32xf32> to vector<2x32xbf16>
    %cst_21 = arith.constant dense<0.000000e+00> : vector<2x128xf32>
    %125 = tpu.matmul %124, %6, %cst_21 {dimension_numbers = #tpu.dot_dimension_numbers<[1], [0], [0], [1], [0, 0, 1, 1], [], []>} : vector<2x32xbf16>, vector<32x128xbf16>, vector<2x128xf32> -> vector<2x128xf32>
    %126 = arith.addf %123, %125 : vector<2x128xf32>
    %127 = arith.negf %126 : vector<2x128xf32>
    %128 = math.exp %127 : vector<2x128xf32>
    %cst_22 = arith.constant 1.000000e+00 : f32
    %129 = vector.broadcast %cst_22 : f32 to vector<2x128xf32>
    %130 = arith.addf %129, %128 : vector<2x128xf32>
    %131 = arith.divf %129, %130 : vector<2x128xf32>
    %132 = math.tanh %126 : vector<2x128xf32>
    %133 = vector.extract_strided_slice %131 {offsets = [0, 0], sizes = [2, 32], strides = [1, 1]} : vector<2x128xf32> to vector<2x32xf32>
    %134 = vector.extract_strided_slice %131 {offsets = [0, 32], sizes = [2, 32], strides = [1, 1]} : vector<2x128xf32> to vector<2x32xf32>
    %135 = vector.extract_strided_slice %132 {offsets = [0, 64], sizes = [2, 32], strides = [1, 1]} : vector<2x128xf32> to vector<2x32xf32>
    %136 = vector.extract_strided_slice %131 {offsets = [0, 96], sizes = [2, 32], strides = [1, 1]} : vector<2x128xf32> to vector<2x32xf32>
    %137 = arith.mulf %134, %120 : vector<2x32xf32>
    %138 = arith.mulf %133, %135 : vector<2x32xf32>
    %139 = arith.addf %137, %138 : vector<2x32xf32>
    %140 = math.tanh %139 : vector<2x32xf32>
    %141 = arith.mulf %136, %140 : vector<2x32xf32>
    %142 = vector.extract_strided_slice %5 {offsets = [14, 0], sizes = [2, 128], strides = [1, 1]} : vector<16x128xf32> to vector<2x128xf32>
    %143 = arith.truncf %141 : vector<2x32xf32> to vector<2x32xbf16>
    %cst_23 = arith.constant dense<0.000000e+00> : vector<2x128xf32>
    %144 = tpu.matmul %143, %6, %cst_23 {dimension_numbers = #tpu.dot_dimension_numbers<[1], [0], [0], [1], [0, 0, 1, 1], [], []>} : vector<2x32xbf16>, vector<32x128xbf16>, vector<2x128xf32> -> vector<2x128xf32>
    %145 = arith.addf %142, %144 : vector<2x128xf32>
    %146 = arith.negf %145 : vector<2x128xf32>
    %147 = math.exp %146 : vector<2x128xf32>
    %cst_24 = arith.constant 1.000000e+00 : f32
    %148 = vector.broadcast %cst_24 : f32 to vector<2x128xf32>
    %149 = arith.addf %148, %147 : vector<2x128xf32>
    %150 = arith.divf %148, %149 : vector<2x128xf32>
    %151 = math.tanh %145 : vector<2x128xf32>
    %152 = vector.extract_strided_slice %150 {offsets = [0, 0], sizes = [2, 32], strides = [1, 1]} : vector<2x128xf32> to vector<2x32xf32>
    %153 = vector.extract_strided_slice %150 {offsets = [0, 32], sizes = [2, 32], strides = [1, 1]} : vector<2x128xf32> to vector<2x32xf32>
    %154 = vector.extract_strided_slice %151 {offsets = [0, 64], sizes = [2, 32], strides = [1, 1]} : vector<2x128xf32> to vector<2x32xf32>
    %155 = vector.extract_strided_slice %150 {offsets = [0, 96], sizes = [2, 32], strides = [1, 1]} : vector<2x128xf32> to vector<2x32xf32>
    %156 = arith.mulf %153, %139 : vector<2x32xf32>
    %157 = arith.mulf %152, %154 : vector<2x32xf32>
    %158 = arith.addf %156, %157 : vector<2x32xf32>
    %159 = math.tanh %158 : vector<2x32xf32>
    %160 = arith.mulf %155, %159 : vector<2x32xf32>
    %161 = arith.truncf %160 : vector<2x32xf32> to vector<2x32xbf16>
    %c0_25 = arith.constant 0 : index
    %c0_26 = arith.constant 0 : index
    %162 = vector.load %arg4[%c0_25, %c0_26] : memref<32x16xbf16, #tpu.memory_space<vmem>>, vector<32x16xbf16>
    %cst_27 = arith.constant dense<0.000000e+00> : vector<2x16xf32>
    %163 = tpu.matmul %161, %162, %cst_27 {dimension_numbers = #tpu.dot_dimension_numbers<[1], [0], [0], [1], [0, 0, 1, 1], [], []>} : vector<2x32xbf16>, vector<32x16xbf16>, vector<2x16xf32> -> vector<2x16xf32>
    %c0_28 = arith.constant 0 : index
    %c0_29 = arith.constant 0 : index
    %164 = vector.load %arg5[%c0_28, %c0_29] : memref<1x16xf32, #tpu.memory_space<vmem>>, vector<1x16xf32>
    %165 = vector.broadcast %164 : vector<1x16xf32> to vector<2x16xf32>
    %166 = arith.addf %163, %165 : vector<2x16xf32>
    %cst_30 = arith.constant 0.000000e+00 : f32
    %167 = vector.broadcast %cst_30 : f32 to vector<2x16xf32>
    %168 = arith.maximumf %166, %167 : vector<2x16xf32>
    %169 = arith.truncf %168 : vector<2x16xf32> to vector<2x16xbf16>
    %c0_31 = arith.constant 0 : index
    %c0_32 = arith.constant 0 : index
    %170 = vector.load %arg6[%c0_31, %c0_32] : memref<16x4xbf16, #tpu.memory_space<vmem>>, vector<16x4xbf16>
    %cst_33 = arith.constant dense<0.000000e+00> : vector<2x4xf32>
    %171 = tpu.matmul %169, %170, %cst_33 {dimension_numbers = #tpu.dot_dimension_numbers<[1], [0], [0], [1], [0, 0, 1, 1], [], []>} : vector<2x16xbf16>, vector<16x4xbf16>, vector<2x4xf32> -> vector<2x4xf32>
    %c0_34 = arith.constant 0 : index
    %c0_35 = arith.constant 0 : index
    %172 = vector.load %arg7[%c0_34, %c0_35] : memref<1x4xf32, #tpu.memory_space<vmem>>, vector<1x4xf32>
    %173 = vector.broadcast %172 : vector<1x4xf32> to vector<2x4xf32>
    %174 = arith.addf %171, %173 : vector<2x4xf32>
    %cst_36 = arith.constant dense<0xFF800000> : vector<2xf32>
    %175 = vector.multi_reduction <maximumf>, %174, %cst_36 [1] : vector<2x4xf32> to vector<2xf32>
    %176 = vector.shape_cast %175 : vector<2xf32> to vector<2x1xf32>
    %177 = vector.broadcast %176 : vector<2x1xf32> to vector<2x4xf32>
    %178 = arith.subf %174, %177 : vector<2x4xf32>
    %179 = math.exp %178 : vector<2x4xf32>
    %cst_37 = arith.constant dense<0.000000e+00> : vector<2xf32>
    %180 = vector.multi_reduction <add>, %179, %cst_37 [1] : vector<2x4xf32> to vector<2xf32>
    %181 = vector.shape_cast %180 : vector<2xf32> to vector<2x1xf32>
    %182 = math.log %181 : vector<2x1xf32>
    %183 = vector.broadcast %182 : vector<2x1xf32> to vector<2x4xf32>
    %184 = arith.subf %178, %183 : vector<2x4xf32>
    %c0_38 = arith.constant 0 : index
    %c0_39 = arith.constant 0 : index
    %185 = vector.load %arg8[%c0_38, %c0_39] : memref<2x4xf32, #tpu.memory_space<vmem>>, vector<2x4xf32>
    tpu.vector_store %arg8[%c0_38, %c0_39], %184 {strides = array<i32>} : memref<2x4xf32, #tpu.memory_space<vmem>>, vector<2x4xf32>,
    return
  }
}

</mosaic_0001>

<llo_original>
// kernel: tpu_custom_call.1
$region0: #{tpu_custom_call.1}
  #allocation0 [shape = 'u32[]', space=smem, size = 0x4, offset = 0x4, fixed_abs, tag = 'smem constant byte address 0x4 - core index']
  #allocation1 [shape = 'u32[144,128]{1,0:T(1,128)}', space=vmem, size = 0x12000, scoped, tag = 'internal scratch']
  %s0 = inlined_call_operand.hbm [shape: bf16[16,24], index: 0, kind: input, shape index: {}]
  %s1 = inlined_call_operand.vmem [shape: bf16[24,128], index: 1, kind: input, shape index: {}]
  %s2 = inlined_call_operand.vmem [shape: bf16[32,128], index: 2, kind: input, shape index: {}]
  %s3 = inlined_call_operand.vmem [shape: f32[1,128], index: 3, kind: input, shape index: {}]
  %s4 = inlined_call_operand.vmem [shape: bf16[32,16], index: 4, kind: input, shape index: {}]
  %s5 = inlined_call_operand.vmem [shape: f32[1,16], index: 5, kind: input, shape index: {}]
  %s6 = inlined_call_operand.vmem [shape: bf16[16,4], index: 6, kind: input, shape index: {}]
  %s7 = inlined_call_operand.vmem [shape: f32[1,4], index: 7, kind: input, shape index: {}]
  %s8 = inlined_call_operand.hbm [shape: f32[2,4], index: 8, kind: output, shape index: {}]
  %s9 = sld [smem:[#allocation0]]
  $region46: #{tpu_custom_call.1} parent=0
    _
  %s11 = ssub.s32 1, %s9
  %s12 = scalar_select 0, %s11, %s9
  $region1: #{tpu_custom_call.1} parent=0
    #allocation2 [shape = 'u8[4096]{0}', space=vmem, size = 0x1000, scoped, tag = 'input window, operand 0, single buffered']
    #allocation3 [shape = 's32[1]{0}', space=sflag, size = 0x4, scoped, tag = 'scoped memory for tpu_custom_call.1']
    #allocation4 [shape = 's32[1]{0}', space=sflag, size = 0x4, scoped, tag = 'scoped memory for tpu_custom_call.1']
    #allocation5 [shape = 'u8[1024]{0}', space=vmem, size = 0x400, scoped, tag = 'output window, operand 0, single buffered']
    %13 = vsyncpa [#allocation3], 0
    %14 = vsyncpa [#allocation4], 0
    // Predicated region
    $region2: #{tpu_custom_call.1} parent=1 // pred_check
      _
    $region3: #{tpu_custom_call.1} parent=1 // pred_check_branch
      %16 = sbr.rel (0) target = $region5
    $region4: #{tpu_custom_call.1} parent=1 // pred_region
      %s18 = ssub.s32 128, 128
      %19 = vsyncadd [#allocation3], %s18
      %s20 = sshll.u32 [#allocation2], 4
      %s21 = int_to_ptr.vmem [resolvable:$true] %s20
      %26 = dma.hbm_to_vmem [thread:$0]  %s0, 128, %s21, [#allocation3], 64, 64, 4
    $region5: #{tpu_custom_call.1} parent=1 // pred_fallthru
      _
    // Predicated region
    $region6: #{tpu_custom_call.1} parent=1 // pred_check
      _
    $region7: #{tpu_custom_call.1} parent=1 // pred_check_branch
      %28 = sbr.rel (0) target = $region9
    $region8: #{tpu_custom_call.1} parent=1 // pred_region
      _
    $region9: #{tpu_custom_call.1} parent=1 // pred_fallthru
      _
    // Predicated region
    $region10: #{tpu_custom_call.1} parent=1 // pred_check
      _
    $region11: #{tpu_custom_call.1} parent=1 // pred_check_branch
      %30 = sbr.rel (0) target = $region13
    $region12: #{tpu_custom_call.1} parent=1 // pred_region
      _
    $region13: #{tpu_custom_call.1} parent=1 // pred_fallthru
      _
    // Predicated region
    $region14: #{tpu_custom_call.1} parent=1 // pred_check
      _
    $region15: #{tpu_custom_call.1} parent=1 // pred_check_branch
      %32 = sbr.rel (0) target = $region17
    $region16: #{tpu_custom_call.1} parent=1 // pred_region
      _
    $region17: #{tpu_custom_call.1} parent=1 // pred_fallthru
      _
    // Predicated region
    $region18: #{tpu_custom_call.1} parent=1 // pred_check
      _
    $region19: #{tpu_custom_call.1} parent=1 // pred_check_branch
      %34 = sbr.rel (0) target = $region21
    $region20: #{tpu_custom_call.1} parent=1 // pred_region
      _
    $region21: #{tpu_custom_call.1} parent=1 // pred_fallthru
      _
    // Predicated region
    $region22: #{tpu_custom_call.1} parent=1 // pred_check
      _
    $region23: #{tpu_custom_call.1} parent=1 // pred_check_branch
      %36 = sbr.rel (0) target = $region25
    $region24: #{tpu_custom_call.1} parent=1 // pred_region
      _
    $region25: #{tpu_custom_call.1} parent=1 // pred_fallthru
      _
    // Predicated region
    $region26: #{tpu_custom_call.1} parent=1 // pred_check
      _
    $region27: #{tpu_custom_call.1} parent=1 // pred_check_branch
      %38 = sbr.rel (0) target = $region29
    $region28: #{tpu_custom_call.1} parent=1 // pred_region
      _
    $region29: #{tpu_custom_call.1} parent=1 // pred_fallthru
      _
    // Predicated region
    $region30: #{tpu_custom_call.1} parent=1 // pred_check
      _
    $region31: #{tpu_custom_call.1} parent=1 // pred_check_branch
      %40 = sbr.rel (0) target = $region33
    $region32: #{tpu_custom_call.1} parent=1 // pred_region
      _
    $region33: #{tpu_custom_call.1} parent=1 // pred_fallthru
      _
    // Predicated region
    $region34: #{tpu_custom_call.1} parent=1 // pred_check
      _
    $region35: #{tpu_custom_call.1} parent=1 // pred_check_branch
      %42 = sbr.rel (0) target = $region37
    $region36: #{tpu_custom_call.1} parent=1 // pred_region
      %43 = dma.done [#allocation3], 128
    $region37: #{tpu_custom_call.1} parent=1 // pred_fallthru
      _
    %v45 = vld [vmem:[#allocation2] sm:$0xf]
    %v46 = vld [vmem:[#allocation2 + $0x4] sm:$0xf]
    %v47 = vld [vmem:[%s1] sm:$0xf]
    %v48 = vld [vmem:[%s1 + $0x4] sm:$0xf]
    %v49 = vld [vmem:[%s1 + $0x8] sm:$0xf]
    %v50 = vld [vmem:[%s3] sm:$0x1]
    %v52 = vlaneseq
    %v53 = vshrl.u32 %v52, 7
    %v54 = vsub.s32 0, %v53
    %v55 = vrot.slane %v50, %v54
    %v59 = vunpack.c.l.b16 %v45
    %v60 = vunpack.c.l.b16 %v46
    %v61 = vpack.c.b16 %v60, %v59
    %v65 = vunpack.c.l.b16 %v47
    %v66 = vunpack.c.l.b16 %v48
    %v67 = vunpack.c.l.b16 %v49
    %v68 = vpack.c.b16 %v66, %v65
    %v69 = vpack.c.b16 %v67, %v67
    %vm71 = vcmask 195584
    %v73 = vsel %vm71, %v61, 0
    %vm75 = vcmask 1043456
    %v77 = vsel %vm75, %v69, 0
    %79 = vmatprep.subr.bf16.mxu0 0
    %80 = vmatpush1.bf16.msra.mxu0 0
    %81 = vmatprep.subr.bf16.mxu0 0
    %82 = vmatpush1.bf16.msra.mxu0 0
    %83 = vmatprep.subr.bf16.mxu0 0
    %84 = vmatpush1.bf16.msra.mxu0 0
    %85 = vmatprep.subr.bf16.mxu0 0
    %86 = vmatpush1.bf16.msra.mxu0 0
    %87 = vmatprep.subr.bf16.mxu0 0
    %88 = vmatpush1.bf16.msra.mxu0 0
    %89 = vmatprep.subr.bf16.mxu0 0
    %90 = vmatpush1.bf16.msra.mxu0 0
    %91 = vmatprep.subr.bf16.mxu0 0
    %92 = vmatpush1.bf16.msra.mxu0 %v77
    %93 = vmatprep.subr.bf16.mxu0 0
    %94 = vmatpush1.bf16.msra.mxu0 %v68
    %95 = vmatprep.subr.bf16.mxu0 0
    %96 = vmatpush2.bf16.msra.mxu0 0
    %97 = vmatprep.subr.bf16.mxu0 0
    %98 = vmatpush2.bf16.msra.mxu0 0
    %99 = vmatprep.subr.bf16.mxu0 0
    %100 = vmatpush2.bf16.msra.mxu0 0
    %101 = vmatprep.subr.bf16.mxu0 0
    %102 = vmatpush2.bf16.msra.mxu0 0
    %103 = vmatprep.subr.bf16.mxu0 0
    %104 = vmatpush2.bf16.msra.mxu0 0
    %105 = vmatprep.subr.bf16.mxu0 0
    %106 = vmatpush2.bf16.msra.mxu0 0
    %107 = vmatprep.subr.bf16.mxu0 0
    %108 = vmatpush2.bf16.msra.mxu0 0
    %109 = vmatprep.subr.bf16.mxu0 0
    %110 = vmatpush2.bf16.msra.mxu0 0
    %111 = vmatprep.mubr.bf16.mxu0 0
    %112 = vmatmul.mubr.bf16.gmra.mxu0 %v73
    %v113 = vpop.f32.mrf.mxu0
    %v114 = vadd.f32 %v55, %v113
    %v115 = vpop.f32.mrf.mxu0
    %v116 = vpop.f32.mrf.mxu0
    %v117 = vadd.f32 %v55, %v116
    %v118 = vpop.f32.mrf.mxu0
    %119 = vdwg.mxu0
    %v120 = vld [vmem:[%s2] sm:$0xf]
    %v121 = vld [vmem:[%s2 + $0x4] sm:$0xf]
    %v122 = vld [vmem:[%s2 + $0x8] sm:$0xf]
    %v123 = vld [vmem:[%s2 + $0xc] sm:$0xf]
    %v128 = vunpack.c.l.b16 %v120
    %v129 = vunpack.c.l.b16 %v121
    %v130 = vunpack.c.l.b16 %v122
    %v131 = vunpack.c.l.b16 %v123
    %v132 = vpack.c.b16 %v129, %v128
    %v133 = vpack.c.b16 %v131, %v130
    %vm136 = vcmask 261120
    %v138 = vsel %vm136, 0, 0
    %140 = vmatprep.subr.bf16.mxu0 0
    %141 = vmatpush1.bf16.msra.mxu0 0
    %142 = vmatprep.subr.bf16.mxu0 0
    %143 = vmatpush1.bf16.msra.mxu0 0
    %144 = vmatprep.subr.bf16.mxu0 0
    %145 = vmatpush1.bf16.msra.mxu0 0
    %146 = vmatprep.subr.bf16.mxu0 0
    %147 = vmatpush1.bf16.msra.mxu0 0
    %148 = vmatprep.subr.bf16.mxu0 0
    %149 = vmatpush1.bf16.msra.mxu0 0
    %150 = vmatprep.subr.bf16.mxu0 0
    %151 = vmatpush1.bf16.msra.mxu0 0
    %152 = vmatprep.subr.bf16.mxu0 0
    %153 = vmatpush1.bf16.msra.mxu0 %v133
    %154 = vmatprep.subr.bf16.mxu0 0
    %155 = vmatpush1.bf16.msra.mxu0 %v132
    %156 = vmatprep.subr.bf16.mxu0 0
    %157 = vmatpush2.bf16.msra.mxu0 0
    %158 = vmatprep.subr.bf16.mxu0 0
    %159 = vmatpush2.bf16.msra.mxu0 0
    %160 = vmatprep.subr.bf16.mxu0 0
    %161 = vmatpush2.bf16.msra.mxu0 0
    %162 = vmatprep.subr.bf16.mxu0 0
    %163 = vmatpush2.bf16.msra.mxu0 0
    %164 = vmatprep.subr.bf16.mxu0 0
    %165 = vmatpush2.bf16.msra.mxu0 0
    %166 = vmatprep.subr.bf16.mxu0 0
    %167 = vmatpush2.bf16.msra.mxu0 0
    %168 = vmatprep.subr.bf16.mxu0 0
    %169 = vmatpush2.bf16.msra.mxu0 0
    %170 = vmatprep.subr.bf16.mxu0 0
    %171 = vmatpush2.bf16.msra.mxu0 0
    %172 = vmatprep.mubr.bf16.mxu0 0
    %173 = vmatmul.mubr.bf16.gmra.mxu0 %v138
    %v174 = vpop.f32.mrf.mxu0
    %v175 = vadd.f32 0.0, %v174
    %v176 = vpop.f32.mrf.mxu0
    %v177 = vpop.f32.mrf.mxu0
    %v178 = vpop.f32.mrf.mxu0
    %179 = vdwg.mxu0
    %v180 = vadd.f32 %v114, %v175
    %v181 = vxor.u32 %v180, 2147483648
    %v182 = vmul.f32 %v181, 1.442695
    %v183 = vpow.pop %v182
    %v184 = vadd.f32 %v183, 1.0
    %v185 = vrcp.pop %v184
    %v186 = vmul.f32 1.0, %v185
    %v187 = vtanh.pop %v180
    %v188 = vmul.f32 %v186, 0.0
    %190 = vrot.lane.b32.xlu0 %v187, 64
    %v191 = vpop.permute.xlu0 %190
    %v193 = vmul.f32 %v186, %v191
    %195 = vrot.lane.b32.xlu0 %v193, 32
    %v196 = vpop.permute.xlu0 %195
    %v198 = vadd.f32 %v188, %v196
    %v199 = vtanh.pop %v198
    %201 = vrot.lane.b32.xlu0 %v199, 64
    %v202 = vpop.permute.xlu0 %201
    %v204 = vmul.f32 %v186, %v202
    %v205 = vpack.c.bf16 %v204, %v204
    %207 = vrot.lane.b32.xlu0 %v205, 32
    %v208 = vpop.permute.xlu0 %207
    %v210 = vsel %vm136, %v208, 0
    %212 = vmatprep.subr.bf16.mxu0 0
    %213 = vmatpush1.bf16.msra.mxu0 0
    %214 = vmatprep.subr.bf16.mxu0 0
    %215 = vmatpush1.bf16.msra.mxu0 0
    %216 = vmatprep.subr.bf16.mxu0 0
    %217 = vmatpush1.bf16.msra.mxu0 0
    %218 = vmatprep.subr.bf16.mxu0 0
    %219 = vmatpush1.bf16.msra.mxu0 0
    %220 = vmatprep.subr.bf16.mxu0 0
    %221 = vmatpush1.bf16.msra.mxu0 0
    %222 = vmatprep.subr.bf16.mxu0 0
    %223 = vmatpush1.bf16.msra.mxu0 0
    %224 = vmatprep.subr.bf16.mxu0 0
    %225 = vmatpush1.bf16.msra.mxu0 %v133
    %226 = vmatprep.subr.bf16.mxu0 0
    %227 = vmatpush1.bf16.msra.mxu0 %v132
    %228 = vmatprep.subr.bf16.mxu0 0
    %229 = vmatpush2.bf16.msra.mxu0 0
    %230 = vmatprep.subr.bf16.mxu0 0
    %231 = vmatpush2.bf16.msra.mxu0 0
    %232 = vmatprep.subr.bf16.mxu0 0
    %233 = vmatpush2.bf16.msra.mxu0 0
    %234 = vmatprep.subr.bf16.mxu0 0
    %235 = vmatpush2.bf16.msra.mxu0 0
    %236 = vmatprep.subr.bf16.mxu0 0
    %237 = vmatpush2.bf16.msra.mxu0 0
    %238 = vmatprep.subr.bf16.mxu0 0
    %239 = vmatpush2.bf16.msra.mxu0 0
    %240 = vmatprep.subr.bf16.mxu0 0
    %241 = vmatpush2.bf16.msra.mxu0 0
    %242 = vmatprep.subr.bf16.mxu0 0
    %243 = vmatpush2.bf16.msra.mxu0 0
    %244 = vmatprep.mubr.bf16.mxu0 0
    %245 = vmatmul.mubr.bf16.gmra.mxu0 %v210
    %v246 = vpop.f32.mrf.mxu0
    %v247 = vadd.f32 0.0, %v246
    %v248 = vpop.f32.mrf.mxu0
    %v249 = vpop.f32.mrf.mxu0
    %v250 = vpop.f32.mrf.mxu0
    %251 = vdwg.mxu0
    %v253 = vrot.slane %v247, 6
    %v255 = vadd.f32 %v114, %v253
    %v256 = vxor.u32 %v255, 2147483648
    %v257 = vmul.f32 %v256, 1.442695
    %v258 = vpow.pop %v257
    %v259 = vadd.f32 %v258, 1.0
    %v260 = vrcp.pop %v259
    %v261 = vmul.f32 1.0, %v260
    %v262 = vtanh.pop %v255
    %v264 = vrot.slane %v198, 6
    %v266 = vmul.f32 %v261, %v264
    %268 = vrot.lane.b32.xlu0 %v262, 64
    %v269 = vpop.permute.xlu0 %268
    %v271 = vmul.f32 %v261, %v269
    %273 = vrot.lane.b32.xlu0 %v271, 32
    %v274 = vpop.permute.xlu0 %273
    %v276 = vadd.f32 %v266, %v274
    %v277 = vtanh.pop %v276
    %279 = vrot.lane.b32.xlu0 %v277, 64
    %v280 = vpop.permute.xlu0 %279
    %v282 = vmul.f32 %v261, %v280
    %v283 = vpack.c.bf16 %v282, %v282
    %v285 = vrot.slane %v283, 1
    %286 = vrot.lane.b32.xlu0 %v285, 32
    %v287 = vpop.permute.xlu0 %286
    %v289 = vsel %vm136, %v287, 0
    %291 = vmatprep.subr.bf16.mxu0 0
    %292 = vmatpush1.bf16.msra.mxu0 0
    %293 = vmatprep.subr.bf16.mxu0 0
    %294 = vmatpush1.bf16.msra.mxu0 0
    %295 = vmatprep.subr.bf16.mxu0 0
    %296 = vmatpush1.bf16.msra.mxu0 0
    %297 = vmatprep.subr.bf16.mxu0 0
    %298 = vmatpush1.bf16.msra.mxu0 0
    %299 = vmatprep.subr.bf16.mxu0 0
    %300 = vmatpush1.bf16.msra.mxu0 0
    %301 = vmatprep.subr.bf16.mxu0 0
    %302 = vmatpush1.bf16.msra.mxu0 0
    %303 = vmatprep.subr.bf16.mxu0 0
    %304 = vmatpush1.bf16.msra.mxu0 %v133
    %305 = vmatprep.subr.bf16.mxu0 0
    %306 = vmatpush1.bf16.msra.mxu0 %v132
    %307 = vmatprep.subr.bf16.mxu0 0
    %308 = vmatpush2.bf16.msra.mxu0 0
    %309 = vmatprep.subr.bf16.mxu0 0
    %310 = vmatpush2.bf16.msra.mxu0 0
    %311 = vmatprep.subr.bf16.mxu0 0
    %312 = vmatpush2.bf16.msra.mxu0 0
    %313 = vmatprep.subr.bf16.mxu0 0
    %314 = vmatpush2.bf16.msra.mxu0 0
    %315 = vmatprep.subr.bf16.mxu0 0
    %316 = vmatpush2.bf16.msra.mxu0 0
    %317 = vmatprep.subr.bf16.mxu0 0
    %318 = vmatpush2.bf16.msra.mxu0 0
    %319 = vmatprep.subr.bf16.mxu0 0
    %320 = vmatpush2.bf16.msra.mxu0 0
    %321 = vmatprep.subr.bf16.mxu0 0
    %322 = vmatpush2.bf16.msra.mxu0 0
    %323 = vmatprep.mubr.bf16.mxu0 0
    %324 = vmatmul.mubr.bf16.gmra.mxu0 %v289
    %v325 = vpop.f32.mrf.mxu0
    %v326 = vadd.f32 0.0, %v325
    %v327 = vpop.f32.mrf.mxu0
    %v328 = vpop.f32.mrf.mxu0
    %v329 = vpop.f32.mrf.mxu0
    %330 = vdwg.mxu0
    %v332 = vrot.slane %v326, 4
    %v334 = vadd.f32 %v114, %v332
    %v335 = vxor.u32 %v334, 2147483648
    %v336 = vmul.f32 %v335, 1.442695
    %v337 = vpow.pop %v336
    %v338 = vadd.f32 %v337, 1.0
    %v339 = vrcp.pop %v338
    %v340 = vmul.f32 1.0, %v339
    %v341 = vtanh.pop %v334
    %v343 = vrot.slane %v276, 6
    %v345 = vmul.f32 %v340, %v343
    %347 = vrot.lane.b32.xlu0 %v341, 64
    %v348 = vpop.permute.xlu0 %347
    %v350 = vmul.f32 %v340, %v348
    %352 = vrot.lane.b32.xlu0 %v350, 32
    %v353 = vpop.permute.xlu0 %352
    %v355 = vadd.f32 %v345, %v353
    %v356 = vtanh.pop %v355
    %358 = vrot.lane.b32.xlu0 %v356, 64
    %v359 = vpop.permute.xlu0 %358
    %v361 = vmul.f32 %v340, %v359
    %v362 = vpack.c.bf16 %v361, %v361
    %v364 = vrot.slane %v362, 2
    %365 = vrot.lane.b32.xlu0 %v364, 32
    %v366 = vpop.permute.xlu0 %365
    %v368 = vsel %vm136, %v366, 0
    %370 = vmatprep.subr.bf16.mxu0 0
    %371 = vmatpush1.bf16.msra.mxu0 0
    %372 = vmatprep.subr.bf16.mxu0 0
    %373 = vmatpush1.bf16.msra.mxu0 0
    %374 = vmatprep.subr.bf16.mxu0 0
    %375 = vmatpush1.bf16.msra.mxu0 0
    %376 = vmatprep.subr.bf16.mxu0 0
    %377 = vmatpush1.bf16.msra.mxu0 0
    %378 = vmatprep.subr.bf16.mxu0 0
    %379 = vmatpush1.bf16.msra.mxu0 0
    %380 = vmatprep.subr.bf16.mxu0 0
    %381 = vmatpush1.bf16.msra.mxu0 0
    %382 = vmatprep.subr.bf16.mxu0 0
    %383 = vmatpush1.bf16.msra.mxu0 %v133
    %384 = vmatprep.subr.bf16.mxu0 0
    %385 = vmatpush1.bf16.msra.mxu0 %v132
    %386 = vmatprep.subr.bf16.mxu0 0
    %387 = vmatpush2.bf16.msra.mxu0 0
    %388 = vmatprep.subr.bf16.mxu0 0
    %389 = vmatpush2.bf16.msra.mxu0 0
    %390 = vmatprep.subr.bf16.mxu0 0
    %391 = vmatpush2.bf16.msra.mxu0 0
    %392 = vmatprep.subr.bf16.mxu0 0
    %393 = vmatpush2.bf16.msra.mxu0 0
    %394 = vmatprep.subr.bf16.mxu0 0
    %395 = vmatpush2.bf16.msra.mxu0 0
    %396 = vmatprep.subr.bf16.mxu0 0
    %397 = vmatpush2.bf16.msra.mxu0 0
    %398 = vmatprep.subr.bf16.mxu0 0
    %399 = vmatpush2.bf16.msra.mxu0 0
    %400 = vmatprep.subr.bf16.mxu0 0
    %401 = vmatpush2.bf16.msra.mxu0 0
    %402 = vmatprep.mubr.bf16.mxu0 0
    %403 = vmatmul.mubr.bf16.gmra.mxu0 %v368
    %v404 = vpop.f32.mrf.mxu0
    %v405 = vadd.f32 0.0, %v404
    %v406 = vpop.f32.mrf.mxu0
    %v407 = vpop.f32.mrf.mxu0
    %v408 = vpop.f32.mrf.mxu0
    %409 = vdwg.mxu0
    %v411 = vrot.slane %v405, 2
    %v413 = vadd.f32 %v114, %v411
    %v414 = vxor.u32 %v413, 2147483648
    %v415 = vmul.f32 %v414, 1.442695
    %v416 = vpow.pop %v415
    %v417 = vadd.f32 %v416, 1.0
    %v418 = vrcp.pop %v417
    %v419 = vmul.f32 1.0, %v418
    %v420 = vtanh.pop %v413
    %v422 = vrot.slane %v355, 6
    %v424 = vmul.f32 %v419, %v422
    %426 = vrot.lane.b32.xlu0 %v420, 64
    %v427 = vpop.permute.xlu0 %426
    %v429 = vmul.f32 %v419, %v427
    %431 = vrot.lane.b32.xlu0 %v429, 32
    %v432 = vpop.permute.xlu0 %431
    %v434 = vadd.f32 %v424, %v432
    %v435 = vtanh.pop %v434
    %437 = vrot.lane.b32.xlu0 %v435, 64
    %v438 = vpop.permute.xlu0 %437
    %v440 = vmul.f32 %v419, %v438
    %v441 = vpack.c.bf16 %v440, %v440
    %v443 = vrot.slane %v441, 3
    %444 = vrot.lane.b32.xlu0 %v443, 32
    %v445 = vpop.permute.xlu0 %444
    %v447 = vsel %vm136, %v445, 0
    %449 = vmatprep.subr.bf16.mxu0 0
    %450 = vmatpush1.bf16.msra.mxu0 0
    %451 = vmatprep.subr.bf16.mxu0 0
    %452 = vmatpush1.bf16.msra.mxu0 0
    %453 = vmatprep.subr.bf16.mxu0 0
    %454 = vmatpush1.bf16.msra.mxu0 0
    %455 = vmatprep.subr.bf16.mxu0 0
    %456 = vmatpush1.bf16.msra.mxu0 0
    %457 = vmatprep.subr.bf16.mxu0 0
    %458 = vmatpush1.bf16.msra.mxu0 0
    %459 = vmatprep.subr.bf16.mxu0 0
    %460 = vmatpush1.bf16.msra.mxu0 0
    %461 = vmatprep.subr.bf16.mxu0 0
    %462 = vmatpush1.bf16.msra.mxu0 %v133
    %463 = vmatprep.subr.bf16.mxu0 0
    %464 = vmatpush1.bf16.msra.mxu0 %v132
    %465 = vmatprep.subr.bf16.mxu0 0
    %466 = vmatpush2.bf16.msra.mxu0 0
    %467 = vmatprep.subr.bf16.mxu0 0
    %468 = vmatpush2.bf16.msra.mxu0 0
    %469 = vmatprep.subr.bf16.mxu0 0
    %470 = vmatpush2.bf16.msra.mxu0 0
    %471 = vmatprep.subr.bf16.mxu0 0
    %472 = vmatpush2.bf16.msra.mxu0 0
    %473 = vmatprep.subr.bf16.mxu0 0
    %474 = vmatpush2.bf16.msra.mxu0 0
    %475 = vmatprep.subr.bf16.mxu0 0
    %476 = vmatpush2.bf16.msra.mxu0 0
    %477 = vmatprep.subr.bf16.mxu0 0
    %478 = vmatpush2.bf16.msra.mxu0 0
    %479 = vmatprep.subr.bf16.mxu0 0
    %480 = vmatpush2.bf16.msra.mxu0 0
    %481 = vmatprep.mubr.bf16.mxu0 0
    %482 = vmatmul.mubr.bf16.gmra.mxu0 %v447
    %v483 = vpop.f32.mrf.mxu0
    %v484 = vadd.f32 0.0, %v483
    %v485 = vpop.f32.mrf.mxu0
    %v486 = vpop.f32.mrf.mxu0
    %v487 = vpop.f32.mrf.mxu0
    %488 = vdwg.mxu0
    %v489 = vadd.f32 %v117, %v484
    %v490 = vxor.u32 %v489, 2147483648
    %v491 = vmul.f32 %v490, 1.442695
    %v492 = vpow.pop %v491
    %v493 = vadd.f32 %v492, 1.0
    %v494 = vrcp.pop %v493
    %v495 = vmul.f32 1.0, %v494
    %v496 = vtanh.pop %v489
    %v498 = vrot.slane %v434, 6
    %v500 = vmul.f32 %v495, %v498
    %502 = vrot.lane.b32.xlu0 %v496, 64
    %v503 = vpop.permute.xlu0 %502
    %v505 = vmul.f32 %v495, %v503
    %507 = vrot.lane.b32.xlu0 %v505, 32
    %v508 = vpop.permute.xlu0 %507
    %v510 = vadd.f32 %v500, %v508
    %v511 = vtanh.pop %v510
    %513 = vrot.lane.b32.xlu0 %v511, 64
    %v514 = vpop.permute.xlu0 %513
    %v516 = vmul.f32 %v495, %v514
    %v517 = vpack.c.bf16 %v516, %v516
    %519 = vrot.lane.b32.xlu0 %v517, 32
    %v520 = vpop.permute.xlu0 %519
    %v522 = vsel %vm136, %v520, 0
    %524 = vmatprep.subr.bf16.mxu0 0
    %525 = vmatpush1.bf16.msra.mxu0 0
    %526 = vmatprep.subr.bf16.mxu0 0
    %527 = vmatpush1.bf16.msra.mxu0 0
    %528 = vmatprep.subr.bf16.mxu0 0
    %529 = vmatpush1.bf16.msra.mxu0 0
    %530 = vmatprep.subr.bf16.mxu0 0
    %531 = vmatpush1.bf16.msra.mxu0 0
    %532 = vmatprep.subr.bf16.mxu0 0
    %533 = vmatpush1.bf16.msra.mxu0 0
    %534 = vmatprep.subr.bf16.mxu0 0
    %535 = vmatpush1.bf16.msra.mxu0 0
    %536 = vmatprep.subr.bf16.mxu0 0
    %537 = vmatpush1.bf16.msra.mxu0 %v133
    %538 = vmatprep.subr.bf16.mxu0 0
    %539 = vmatpush1.bf16.msra.mxu0 %v132
    %540 = vmatprep.subr.bf16.mxu0 0
    %541 = vmatpush2.bf16.msra.mxu0 0
    %542 = vmatprep.subr.bf16.mxu0 0
    %543 = vmatpush2.bf16.msra.mxu0 0
    %544 = vmatprep.subr.bf16.mxu0 0
    %545 = vmatpush2.bf16.msra.mxu0 0
    %546 = vmatprep.subr.bf16.mxu0 0
    %547 = vmatpush2.bf16.msra.mxu0 0
    %548 = vmatprep.subr.bf16.mxu0 0
    %549 = vmatpush2.bf16.msra.mxu0 0
    %550 = vmatprep.subr.bf16.mxu0 0
    %551 = vmatpush2.bf16.msra.mxu0 0
    %552 = vmatprep.subr.bf16.mxu0 0
    %553 = vmatpush2.bf16.msra.mxu0 0
    %554 = vmatprep.subr.bf16.mxu0 0
    %555 = vmatpush2.bf16.msra.mxu0 0
    %556 = vmatprep.mubr.bf16.mxu0 0
    %557 = vmatmul.mubr.bf16.gmra.mxu0 %v522
    %v558 = vpop.f32.mrf.mxu0
    %v559 = vadd.f32 0.0, %v558
    %v560 = vpop.f32.mrf.mxu0
    %v561 = vpop.f32.mrf.mxu0
    %v562 = vpop.f32.mrf.mxu0
    %563 = vdwg.mxu0
    %v565 = vrot.slane %v559, 6
    %v567 = vadd.f32 %v117, %v565
    %v568 = vxor.u32 %v567, 2147483648
    %v569 = vmul.f32 %v568, 1.442695
    %v570 = vpow.pop %v569
    %v571 = vadd.f32 %v570, 1.0
    %v572 = vrcp.pop %v571
    %v573 = vmul.f32 1.0, %v572
    %v574 = vtanh.pop %v567
    %v576 = vrot.slane %v510, 6
    %v578 = vmul.f32 %v573, %v576
    %580 = vrot.lane.b32.xlu0 %v574, 64
    %v581 = vpop.permute.xlu0 %580
    %v583 = vmul.f32 %v573, %v581
    %585 = vrot.lane.b32.xlu0 %v583, 32
    %v586 = vpop.permute.xlu0 %585
    %v588 = vadd.f32 %v578, %v586
    %v589 = vtanh.pop %v588
    %591 = vrot.lane.b32.xlu0 %v589, 64
    %v592 = vpop.permute.xlu0 %591
    %v594 = vmul.f32 %v573, %v592
    %v595 = vpack.c.bf16 %v594, %v594
    %v597 = vrot.slane %v595, 1
    %598 = vrot.lane.b32.xlu0 %v597, 32
    %v599 = vpop.permute.xlu0 %598
    %v601 = vsel %vm136, %v599, 0
    %603 = vmatprep.subr.bf16.mxu0 0
    %604 = vmatpush1.bf16.msra.mxu0 0
    %605 = vmatprep.subr.bf16.mxu0 0
    %606 = vmatpush1.bf16.msra.mxu0 0
    %607 = vmatprep.subr.bf16.mxu0 0
    %608 = vmatpush1.bf16.msra.mxu0 0
    %609 = vmatprep.subr.bf16.mxu0 0
    %610 = vmatpush1.bf16.msra.mxu0 0
    %611 = vmatprep.subr.bf16.mxu0 0
    %612 = vmatpush1.bf16.msra.mxu0 0
    %613 = vmatprep.subr.bf16.mxu0 0
    %614 = vmatpush1.bf16.msra.mxu0 0
    %615 = vmatprep.subr.bf16.mxu0 0
    %616 = vmatpush1.bf16.msra.mxu0 %v133
    %617 = vmatprep.subr.bf16.mxu0 0
    %618 = vmatpush1.bf16.msra.mxu0 %v132
    %619 = vmatprep.subr.bf16.mxu0 0
    %620 = vmatpush2.bf16.msra.mxu0 0
    %621 = vmatprep.subr.bf16.mxu0 0
    %622 = vmatpush2.bf16.msra.mxu0 0
    %623 = vmatprep.subr.bf16.mxu0 0
    %624 = vmatpush2.bf16.msra.mxu0 0
    %625 = vmatprep.subr.bf16.mxu0 0
    %626 = vmatpush2.bf16.msra.mxu0 0
    %627 = vmatprep.subr.bf16.mxu0 0
    %628 = vmatpush2.bf16.msra.mxu0 0
    %629 = vmatprep.subr.bf16.mxu0 0
    %630 = vmatpush2.bf16.msra.mxu0 0
    %631 = vmatprep.subr.bf16.mxu0 0
    %632 = vmatpush2.bf16.msra.mxu0 0
    %633 = vmatprep.subr.bf16.mxu0 0
    %634 = vmatpush2.bf16.msra.mxu0 0
    %635 = vmatprep.mubr.bf16.mxu0 0
    %636 = vmatmul.mubr.bf16.gmra.mxu0 %v601
    %v637 = vpop.f32.mrf.mxu0
    %v638 = vadd.f32 0.0, %v637
    %v639 = vpop.f32.mrf.mxu0
    %v640 = vpop.f32.mrf.mxu0
    %v641 = vpop.f32.mrf.mxu0
    %642 = vdwg.mxu0
    %v644 = vrot.slane %v638, 4
    %v646 = vadd.f32 %v117, %v644
    %v647 = vxor.u32 %v646, 2147483648
    %v648 = vmul.f32 %v647, 1.442695
    %v649 = vpow.pop %v648
    %v650 = vadd.f32 %v649, 1.0
    %v651 = vrcp.pop %v650
    %v652 = vmul.f32 1.0, %v651
    %v653 = vtanh.pop %v646
    %v655 = vrot.slane %v588, 6
    %v657 = vmul.f32 %v652, %v655
    %659 = vrot.lane.b32.xlu0 %v653, 64
    %v660 = vpop.permute.xlu0 %659
    %v662 = vmul.f32 %v652, %v660
    %664 = vrot.lane.b32.xlu0 %v662, 32
    %v665 = vpop.permute.xlu0 %664
    %v667 = vadd.f32 %v657, %v665
    %v668 = vtanh.pop %v667
    %670 = vrot.lane.b32.xlu0 %v668, 64
    %v671 = vpop.permute.xlu0 %670
    %v673 = vmul.f32 %v652, %v671
    %v674 = vpack.c.bf16 %v673, %v673
    %v676 = vrot.slane %v674, 2
    %677 = vrot.lane.b32.xlu0 %v676, 32
    %v678 = vpop.permute.xlu0 %677
    %v680 = vsel %vm136, %v678, 0
    %682 = vmatprep.subr.bf16.mxu0 0
    %683 = vmatpush1.bf16.msra.mxu0 0
    %684 = vmatprep.subr.bf16.mxu0 0
    %685 = vmatpush1.bf16.msra.mxu0 0
    %686 = vmatprep.subr.bf16.mxu0 0
    %687 = vmatpush1.bf16.msra.mxu0 0
    %688 = vmatprep.subr.bf16.mxu0 0
    %689 = vmatpush1.bf16.msra.mxu0 0
    %690 = vmatprep.subr.bf16.mxu0 0
    %691 = vmatpush1.bf16.msra.mxu0 0
    %692 = vmatprep.subr.bf16.mxu0 0
    %693 = vmatpush1.bf16.msra.mxu0 0
    %694 = vmatprep.subr.bf16.mxu0 0
    %695 = vmatpush1.bf16.msra.mxu0 %v133
    %696 = vmatprep.subr.bf16.mxu0 0
    %697 = vmatpush1.bf16.msra.mxu0 %v132
    %698 = vmatprep.subr.bf16.mxu0 0
    %699 = vmatpush2.bf16.msra.mxu0 0
    %700 = vmatprep.subr.bf16.mxu0 0
    %701 = vmatpush2.bf16.msra.mxu0 0
    %702 = vmatprep.subr.bf16.mxu0 0
    %703 = vmatpush2.bf16.msra.mxu0 0
    %704 = vmatprep.subr.bf16.mxu0 0
    %705 = vmatpush2.bf16.msra.mxu0 0
    %706 = vmatprep.subr.bf16.mxu0 0
    %707 = vmatpush2.bf16.msra.mxu0 0
    %708 = vmatprep.subr.bf16.mxu0 0
    %709 = vmatpush2.bf16.msra.mxu0 0
    %710 = vmatprep.subr.bf16.mxu0 0
    %711 = vmatpush2.bf16.msra.mxu0 0
    %712 = vmatprep.subr.bf16.mxu0 0
    %713 = vmatpush2.bf16.msra.mxu0 0
    %714 = vmatprep.mubr.bf16.mxu0 0
    %715 = vmatmul.mubr.bf16.gmra.mxu0 %v680
    %v716 = vpop.f32.mrf.mxu0
    %v717 = vadd.f32 0.0, %v716
    %v718 = vpop.f32.mrf.mxu0
    %v719 = vpop.f32.mrf.mxu0
    %v720 = vpop.f32.mrf.mxu0
    %721 = vdwg.mxu0
    %v723 = vrot.slane %v717, 2
    %v725 = vadd.f32 %v117, %v723
    %v726 = vxor.u32 %v725, 2147483648
    %v727 = vmul.f32 %v726, 1.442695
    %v728 = vpow.pop %v727
    %v729 = vadd.f32 %v728, 1.0
    %v730 = vrcp.pop %v729
    %v731 = vmul.f32 1.0, %v730
    %v732 = vtanh.pop %v725
    %v734 = vrot.slane %v667, 6
    %v736 = vmul.f32 %v731, %v734
    %738 = vrot.lane.b32.xlu0 %v732, 64
    %v739 = vpop.permute.xlu0 %738
    %v741 = vmul.f32 %v731, %v739
    %743 = vrot.lane.b32.xlu0 %v741, 32
    %v744 = vpop.permute.xlu0 %743
    %v746 = vadd.f32 %v736, %v744
    %v747 = vtanh.pop %v746
    %749 = vrot.lane.b32.xlu0 %v747, 64
    %v750 = vpop.permute.xlu0 %749
    %v752 = vmul.f32 %v731, %v750
    %v753 = vpack.c.bf16 %v752, %v752
    %v754 = vld [vmem:[%s4] sm:$0xf]
    %v755 = vld [vmem:[%s4 + $0x4] sm:$0xf]
    %v756 = vld [vmem:[%s4 + $0x8] sm:$0xf]
    %v757 = vld [vmem:[%s4 + $0xc] sm:$0xf]
    %v758 = vld [vmem:[%s5] sm:$0x1]
    %v760 = vlaneseq
    %v761 = vshrl.u32 %v760, 7
    %v762 = vsub.s32 0, %v761
    %v763 = vrot.slane %v758, %v762
    %v766 = vrot.slane %v753, 3
    %767 = vrot.lane.b32.xlu0 %v766, 32
    %v768 = vpop.permute.xlu0 %767
    %v773 = vunpack.c.l.b16 %v754
    %v774 = vunpack.c.l.b16 %v755
    %v775 = vunpack.c.l.b16 %v756
    %v776 = vunpack.c.l.b16 %v757
    %v777 = vpack.c.b16 %v774, %v773
    %v778 = vpack.c.b16 %v776, %v775
    %v782 = vsel %vm136, %v768, 0
    %784 = vmatprep.subr.bf16.mxu0 0
    %785 = vmatpush1.bf16.msra.mxu0 0
    %786 = vmatprep.subr.bf16.mxu0 0
    %787 = vmatpush1.bf16.msra.mxu0 0
    %788 = vmatprep.subr.bf16.mxu0 0
    %789 = vmatpush1.bf16.msra.mxu0 0
    %790 = vmatprep.subr.bf16.mxu0 0
    %791 = vmatpush1.bf16.msra.mxu0 0
    %792 = vmatprep.subr.bf16.mxu0 0
    %793 = vmatpush1.bf16.msra.mxu0 0
    %794 = vmatprep.subr.bf16.mxu0 0
    %795 = vmatpush1.bf16.msra.mxu0 0
    %796 = vmatprep.subr.bf16.mxu0 0
    %797 = vmatpush1.bf16.msra.mxu0 %v778
    %798 = vmatprep.subr.bf16.mxu0 0
    %799 = vmatpush1.bf16.msra.mxu0 %v777
    %800 = vmatprep.subr.bf16.mxu0 0
    %801 = vmatpush2.bf16.msra.mxu0 0
    %802 = vmatprep.subr.bf16.mxu0 0
    %803 = vmatpush2.bf16.msra.mxu0 0
    %804 = vmatprep.subr.bf16.mxu0 0
    %805 = vmatpush2.bf16.msra.mxu0 0
    %806 = vmatprep.subr.bf16.mxu0 0
    %807 = vmatpush2.bf16.msra.mxu0 0
    %808 = vmatprep.subr.bf16.mxu0 0
    %809 = vmatpush2.bf16.msra.mxu0 0
    %810 = vmatprep.subr.bf16.mxu0 0
    %811 = vmatpush2.bf16.msra.mxu0 0
    %812 = vmatprep.subr.bf16.mxu0 0
    %813 = vmatpush2.bf16.msra.mxu0 0
    %814 = vmatprep.subr.bf16.mxu0 0
    %815 = vmatpush2.bf16.msra.mxu0 0
    %816 = vmatprep.mubr.bf16.mxu0 0
    %817 = vmatmul.mubr.bf16.gmra.mxu0 %v782
    %v818 = vpop.f32.mrf.mxu0
    %v819 = vadd.f32 %v763, %v818
    %v820 = vpop.f32.mrf.mxu0
    %v821 = vpop.f32.mrf.mxu0
    %v822 = vpop.f32.mrf.mxu0
    %823 = vdwg.mxu0
    %v824 = vmax.f32 %v819, 0.0
    %v825 = vpack.c.bf16 %v824, %v824
    %v826 = vld [vmem:[%s6] sm:$0xf]
    %v827 = vld [vmem:[%s6 + $0x4] sm:$0xf]
    %v828 = vld [vmem:[%s7] sm:$0x1]
    %v830 = vlaneseq
    %v831 = vshrl.u32 %v830, 7
    %v832 = vsub.s32 0, %v831
    %v833 = vrot.slane %v828, %v832
    %v837 = vunpack.c.l.b16 %v826
    %v838 = vunpack.c.l.b16 %v827
    %v839 = vpack.c.b16 %v838, %v837
    %vm841 = vcmask 130048
    %v843 = vsel %vm841, %v825, 0
    %845 = vmatprep.subr.bf16.mxu0 0
    %846 = vmatpush1.bf16.msra.mxu0 0
    %847 = vmatprep.subr.bf16.mxu0 0
    %848 = vmatpush1.bf16.msra.mxu0 0
    %849 = vmatprep.subr.bf16.mxu0 0
    %850 = vmatpush1.bf16.msra.mxu0 0
    %851 = vmatprep.subr.bf16.mxu0 0
    %852 = vmatpush1.bf16.msra.mxu0 0
    %853 = vmatprep.subr.bf16.mxu0 0
    %854 = vmatpush1.bf16.msra.mxu0 0
    %855 = vmatprep.subr.bf16.mxu0 0
    %856 = vmatpush1.bf16.msra.mxu0 0
    %857 = vmatprep.subr.bf16.mxu0 0
    %858 = vmatpush1.bf16.msra.mxu0 0
    %859 = vmatprep.subr.bf16.mxu0 0
    %860 = vmatpush1.bf16.msra.mxu0 %v839
    %861 = vmatprep.subr.bf16.mxu0 0
    %862 = vmatpush2.bf16.msra.mxu0 0
    %863 = vmatprep.subr.bf16.mxu0 0
    %864 = vmatpush2.bf16.msra.mxu0 0
    %865 = vmatprep.subr.bf16.mxu0 0
    %866 = vmatpush2.bf16.msra.mxu0 0
    %867 = vmatprep.subr.bf16.mxu0 0
    %868 = vmatpush2.bf16.msra.mxu0 0
    %869 = vmatprep.subr.bf16.mxu0 0
    %870 = vmatpush2.bf16.msra.mxu0 0
    %871 = vmatprep.subr.bf16.mxu0 0
    %872 = vmatpush2.bf16.msra.mxu0 0
    %873 = vmatprep.subr.bf16.mxu0 0
    %874 = vmatpush2.bf16.msra.mxu0 0
    %875 = vmatprep.subr.bf16.mxu0 0
    %876 = vmatpush2.bf16.msra.mxu0 0
    %877 = vmatprep.mubr.bf16.mxu0 0
    %878 = vmatmul.mubr.bf16.gmra.mxu0 %v843
    %v879 = vpop.f32.mrf.mxu0
    %v880 = vadd.f32 %v833, %v879
    %v881 = vpop.f32.mrf.mxu0
    %v882 = vpop.f32.mrf.mxu0
    %v883 = vpop.f32.mrf.mxu0
    %884 = vdwg.mxu0
    %vm885 = vcmask 25600
    %v886 = vsel %vm885, %v880, -inf
    %887 = vmax.xlane.f32.xlu0 %v886
    %v888 = vpop.xlane.xlu0 %887
    %v889 = vsub.f32 %v880, %v888
    %v890 = vmul.f32 %v889, 1.442695
    %v891 = vpow.pop %v890
    %v892 = vsel %vm885, %v891, 0.0
    %893 = vadd.xlane.f32.xlu0 %v892
    %v894 = vpop.xlane.xlu0 %893
    %v895 = vlog2.pop %v894
    %v896 = vmul.f32 %v895, 0.6931472
    %v897 = vsub.f32 %v889, %v896
    %898 = vst.msk [vmem:[#allocation5] sm:$0x3] %vm885, %v897
    // Predicated region
    $region38: #{tpu_custom_call.1} parent=1 // pred_check
      _
    $region39: #{tpu_custom_call.1} parent=1 // pred_check_branch
      %900 = sbr.rel (0) target = $region41
    $region40: #{tpu_custom_call.1} parent=1 // pred_region
      %s902 = ssub.s32 32, 32
      %903 = vsyncadd [#allocation4], %s902
      %s905 = sshll.u32 [#allocation5], 4
      %s906 = int_to_ptr.vmem [resolvable:$true] %s905
      %908 = dma.vmem_to_hbm [thread:$0]  %s906, 32, %s8, [#allocation4]
    $region41: #{tpu_custom_call.1} parent=1 // pred_fallthru
      _
    // Predicated region
    $region42: #{tpu_custom_call.1} parent=1 // pred_check
      _
    $region43: #{tpu_custom_call.1} parent=1 // pred_check_branch
      %910 = sbr.rel (0) target = $region45
    $region44: #{tpu_custom_call.1} parent=1 // pred_region
      %911 = dma.done [#allocation4], 32
    $region45: #{tpu_custom_call.1} parent=1 // pred_fallthru
      _
    %912 = vsyncpa [#allocation3], 1
    %913 = vsyncpa [#allocation4], 1

</llo_original>
